<compile_context>
chip_gen: v7x
topology: tpu7x:2x2x1
jax: 0.10.0
libtpu: 0.0.40
codegen_flags: <defaults>
</compile_context>

<pallas_src>
import jax
import jax.numpy as jnp
from jax.experimental import pallas as pl
from jax.experimental.pallas import tpu as pltpu

LANE = 128
SUBLANE = 8
_BASE = SUBLANE * LANE  # 1024


def _make_partial_kernel(tile_rows, valid_rows):
    ragged = (valid_rows % tile_rows) != 0

    def kernel(x_ref, out_ref):
        x = x_ref[...].astype(jnp.float32)                     # (tile_rows, 128)
        diff = jnp.maximum(jnp.abs(x - 0.5), 0.01)
        if ragged:
            # Mask rows past the true row count in the boundary block
            # (out-of-bounds data in the block is unspecified -> select it away).
            row0 = pl.program_id(0) * tile_rows
            row_ids = row0 + jax.lax.broadcasted_iota(
                jnp.int32, (tile_rows, LANE), 0)
            diff = jnp.where(row_ids < valid_rows, diff, 0.0)
        # Fold row-groups of 8 into one (8, 128) vreg partial: pure VPU adds.
        partial = jnp.sum(
            diff.reshape(tile_rows // SUBLANE, SUBLANE, LANE), axis=0)
        out_ref[...] = partial.reshape(1, SUBLANE, LANE)

    return kernel


def binary_reg(x, alpha=1.0, tile_rows=2048):
    """Pallas implementation of BinaryReg.forward. Returns a scalar float32."""
    x_flat = x.reshape(-1)            # keep native dtype; cast to f32 in-kernel
    n = x_flat.size

    pad = (-n) % _BASE
    if pad:
        # Rare fallback (numel not a multiple of 8*128).  Pad value 0.5 makes
        # every padded element contribute exactly 0.01; subtracted below.
        # TODO(synk): this path materializes one extra HBM copy of the input;
        # aligned inputs (the common NCHW case) take the zero-copy reshape path.
        x_flat = jnp.pad(x_flat, (0, pad), constant_values=0.5)

    x2d = x_flat.reshape(-1, LANE)
    rows = x2d.shape[0]                                    # multiple of SUBLANE

    tr = max(SUBLANE, (min(int(tile_rows), rows) // SUBLANE) * SUBLANE)
    num_blocks = pl.cdiv(rows, tr)

    partials = pl.pallas_call(
        _make_partial_kernel(tr, rows),
        out_shape=jax.ShapeDtypeStruct((num_blocks, SUBLANE, LANE), jnp.float32),
        grid_spec=pltpu.PrefetchScalarGridSpec(
            num_scalar_prefetch=0,
            grid=(num_blocks,),
            in_specs=[pl.BlockSpec((tr, LANE), lambda i: (i, 0))],
            out_specs=pl.BlockSpec((1, SUBLANE, LANE), lambda i: (i, 0, 0)),
        ),
        compiler_params=pltpu.CompilerParams(
            dimension_semantics=("parallel",)),
    )(x2d)

    total = jnp.sum(partials, dtype=jnp.float32)
    if pad:
        total = total - jnp.float32(pad) * jnp.float32(0.01)
    return jnp.float32(alpha) / total


def binary_reg_reference(x, alpha=1.0):
    diff = jnp.maximum(jnp.abs(x.astype(jnp.float32) - 0.5), 0.01)
    return jnp.float32(alpha) / jnp.sum(diff)


if __name__ == "__main__":
    key = jax.random.PRNGKey(0)

    # NCHW input, sigmoid-like activations in [0, 1].
    x = jax.random.uniform(key, (2, 4, 16, 16), dtype=jnp.float32)
    loss = jax.block_until_ready(binary_reg(x, alpha=1.0))
    ref = jax.block_until_ready(binary_reg_reference(x, alpha=1.0))
    assert jnp.allclose(loss, ref, rtol=1e-5, atol=1e-6), (loss, ref)

    # Multi-block path (several grid steps on the parallel axis), aligned.
    x2 = jax.random.uniform(jax.random.PRNGKey(1), (2, 4, 32, 32),
                            dtype=jnp.float32)
    loss2 = jax.block_until_ready(binary_reg(x2, alpha=0.5, tile_rows=16))
    ref2 = jax.block_until_ready(binary_reg_reference(x2, alpha=0.5))
    assert jnp.allclose(loss2, ref2, rtol=1e-5, atol=1e-6), (loss2, ref2)

    print("KERNEL_OK")
</pallas_src>

<mosaic_0001>
module attributes {stable_mosaic.version = 11 : i64} {
  func.func @kernel(%arg0: i32, %arg1: memref<16x128xf32, #tpu.memory_space<vmem>>, %arg2: memref<1x8x128xf32, #tpu.memory_space<vmem>>) attributes {dimension_semantics = [#tpu.dimension_semantics<parallel>], iteration_bounds = array<i64: 1>, scalar_prefetch = 0 : i64, scratch_operands = 0 : i64, tpu.core_type = #tpu.core_type<tc>, window_params = [{transform_indices = @transform_0, window_bounds = array<i64: 16, 128>}, {transform_indices = @transform_1, window_bounds = array<i64: 1, 8, 128>}]} {
    %c0 = arith.constant 0 : index
    %c0_0 = arith.constant 0 : index
    %0 = vector.load %arg1[%c0, %c0_0] : memref<16x128xf32, #tpu.memory_space<vmem>>, vector<16x128xf32>
    %cst = arith.constant 5.000000e-01 : f32
    %1 = vector.broadcast %cst : f32 to vector<16x128xf32>
    %2 = arith.subf %0, %1 : vector<16x128xf32>
    %3 = math.absf %2 : vector<16x128xf32>
    %cst_1 = arith.constant 0.00999999977 : f32
    %4 = vector.broadcast %cst_1 : f32 to vector<16x128xf32>
    %5 = arith.maximumf %3, %4 : vector<16x128xf32>
    %6 = vector.shape_cast %5 : vector<16x128xf32> to vector<2x8x128xf32>
    %cst_2 = arith.constant dense<0.000000e+00> : vector<8x128xf32>
    %7 = vector.multi_reduction <add>, %6, %cst_2 [0] : vector<2x8x128xf32> to vector<8x128xf32>
    %8 = vector.shape_cast %7 : vector<8x128xf32> to vector<1x8x128xf32>
    %c0_3 = arith.constant 0 : index
    %c0_4 = arith.constant 0 : index
    %c0_5 = arith.constant 0 : index
    %9 = vector.load %arg2[%c0_3, %c0_4, %c0_5] : memref<1x8x128xf32, #tpu.memory_space<vmem>>, vector<1x8x128xf32>
    tpu.vector_store %arg2[%c0_3, %c0_4, %c0_5], %8 {strides = array<i32>} : memref<1x8x128xf32, #tpu.memory_space<vmem>>, vector<1x8x128xf32>,
    return
  }
  func.func @transform_0(%arg0: i32) -> (i32, i32) {
    %c0_i32 = arith.constant 0 : i32
    %c0_i32_0 = arith.constant 0 : i32
    return %arg0, %c0_i32 : i32, i32
  }
  func.func @transform_1(%arg0: i32) -> (i32, i32, i32) {
    %c0_i32 = arith.constant 0 : i32
    %c0_i32_0 = arith.constant 0 : i32
    %c0_i32_1 = arith.constant 0 : i32
    return %arg0, %c0_i32, %c0_i32_0 : i32, i32, i32
  }
}

</mosaic_0001>

<llo_original>
// kernel: tpu_custom_call.1
$region0: #{tpu_custom_call.1}
  #allocation0 [shape = 'u32[]', space=smem, size = 0x4, offset = 0x4, fixed_abs, tag = 'smem constant byte address 0x4 - core index']
  #allocation1 [shape = 'u32[144,128]{1,0:T(1,128)}', space=vmem, size = 0x12000, scoped, tag = 'internal scratch']
  %s0 = inlined_call_operand.hbm [shape: f32[16,128], index: 0, kind: input, shape index: {}]
  %s1 = inlined_call_operand.hbm [shape: f32[1,8,128], index: 1, kind: output, shape index: {}]
  %s2 = sld [smem:[#allocation0]]
  $region18: #{tpu_custom_call.1} parent=0
    _
  %s4 = ssub.s32 1, %s2
  %s5 = scalar_select 0, %s4, %s2
  $region1: #{tpu_custom_call.1} parent=0
    #allocation2 [shape = 'u8[8192]{0}', space=vmem, size = 0x2000, scoped, tag = 'input window, operand 0, single buffered']
    #allocation3 [shape = 's32[1]{0}', space=sflag, size = 0x4, scoped, tag = 'scoped memory for tpu_custom_call.1']
    #allocation4 [shape = 's32[1]{0}', space=sflag, size = 0x4, scoped, tag = 'scoped memory for tpu_custom_call.1']
    #allocation5 [shape = 'u8[4096]{0}', space=vmem, size = 0x1000, scoped, tag = 'output window, operand 0, single buffered']
    %6 = vsyncpa [#allocation3], 0
    %7 = vsyncpa [#allocation4], 0
    // Predicated region
    $region2: #{tpu_custom_call.1} parent=1 // pred_check
      _
    $region3: #{tpu_custom_call.1} parent=1 // pred_check_branch
      %9 = sbr.rel (0) target = $region5
    $region4: #{tpu_custom_call.1} parent=1 // pred_region
      %s11 = ssub.s32 256, 256
      %12 = vsyncadd [#allocation3], %s11
      %s13 = sshll.u32 [#allocation2], 4
      %s14 = int_to_ptr.vmem [resolvable:$true] %s13
      %19 = dma.hbm_to_vmem [thread:$0]  %s0, 256, %s14, [#allocation3], 128, 128, 8
    $region5: #{tpu_custom_call.1} parent=1 // pred_fallthru
      _
    // Predicated region
    $region6: #{tpu_custom_call.1} parent=1 // pred_check
      _
    $region7: #{tpu_custom_call.1} parent=1 // pred_check_branch
      %21 = sbr.rel (0) target = $region9
    $region8: #{tpu_custom_call.1} parent=1 // pred_region
      %22 = dma.done [#allocation3], 256
    $region9: #{tpu_custom_call.1} parent=1 // pred_fallthru
      _
    %v23 = vld [vmem:[#allocation2] sm:$0xff]
    %v24 = vld [vmem:[#allocation2 + $0x8] sm:$0xff]
    %v25 = vsub.f32 %v23, 0.5
    %v26 = vsub.f32 %v24, 0.5
    %v27 = vand.u32 2147483647, %v25
    %v28 = vand.u32 2147483647, %v26
    %v29 = vmax.f32 %v27, 0.01
    %v30 = vmax.f32 %v28, 0.01
    %v31 = vadd.f32 %v29, %v30
    %32 = vst [vmem:[#allocation5] sm:$0xff] %v31
    // Predicated region
    $region10: #{tpu_custom_call.1} parent=1 // pred_check
      _
    $region11: #{tpu_custom_call.1} parent=1 // pred_check_branch
      %34 = sbr.rel (0) target = $region13
    $region12: #{tpu_custom_call.1} parent=1 // pred_region
      %s36 = ssub.s32 128, 128
      %37 = vsyncadd [#allocation4], %s36
      %s39 = sshll.u32 [#allocation5], 4
      %s40 = int_to_ptr.vmem [resolvable:$true] %s39
      %42 = dma.vmem_to_hbm [thread:$0]  %s40, 128, %s1, [#allocation4]
    $region13: #{tpu_custom_call.1} parent=1 // pred_fallthru
      _
    // Predicated region
    $region14: #{tpu_custom_call.1} parent=1 // pred_check
      _
    $region15: #{tpu_custom_call.1} parent=1 // pred_check_branch
      %44 = sbr.rel (0) target = $region17
    $region16: #{tpu_custom_call.1} parent=1 // pred_region
      %45 = dma.done [#allocation4], 128
    $region17: #{tpu_custom_call.1} parent=1 // pred_fallthru
      _
    %46 = vsyncpa [#allocation3], 1
    %47 = vsyncpa [#allocation4], 1

</llo_original>
